<compile_context>
chip_gen: v5e
topology: v5e:2x2
jax: 0.10.0
libtpu: 0.0.40
codegen_flags: <defaults>
</compile_context>

<pallas_src>
import jax
import jax.numpy as jnp
from jax import lax
from jax.experimental import pallas as pl
from jax.experimental.pallas import tpu as pltpu


# ---------------------------------------------------------------------------
# Small helpers
# ---------------------------------------------------------------------------
def _round_up(a, b):
    return -(-a // b) * b


def _tpu_vmem_and_cores():
    """Physical VMEM bytes and TensorCore count (conservative fallbacks)."""
    vmem_cap = 64 * 1024 * 1024          # v7x-sized conservative default
    cores = 1                            # v5e/v6e: single TensorCore
    try:
        info = pltpu.get_tpu_info()
        for name in ("vmem_capacity_bytes", "vmem_bytes", "vmem_capacity"):
            val = getattr(info, name, None)
            if val:
                vmem_cap = int(val)
                break
        for name in ("num_cores", "num_tensorcores", "tensorcore_count",
                     "core_count", "cores_per_chip"):
            val = getattr(info, name, None)
            if val:
                cores = int(val)
                break
    except Exception:
        pass
    return vmem_cap, cores


def _footprint_per_plane(H, W, in_itemsize, fold_lanes):
    """Honest VMEM bytes per image plane (padded, incl. f32 temporaries)."""
    lane_w = _round_up(W, 128)
    sub_h = _round_up(H, 8)
    hb = _round_up(3 * H + 16, 8)
    plane_in = sub_h * lane_w * in_itemsize
    plane_f32 = sub_h * lane_w * 4
    out_plane = (_round_up(H * W, 128) * in_itemsize if fold_lanes
                 else plane_in)
    return (2 * plane_in          # double-buffered input block
            + 2 * out_plane       # double-buffered output block
            + hb * lane_w * 4     # row-padded f32 staging scratch
            + 5 * plane_f32)      # in-kernel f32 temporaries (headroom)


# ---------------------------------------------------------------------------
# Interpolation matrix builders (plain JAX wrapper glue)
# ---------------------------------------------------------------------------
def _build_col_matrix(tx, W, dtype):
    """B[w_in, w_out]: out[., w] = sum_l t[., l] * B[l, w]  (2-banded)."""
    dx0f = jnp.floor(tx)
    fx = (tx - dx0f).astype(jnp.float32)
    dx0 = dx0f.astype(jnp.int32)
    w_in = jnp.arange(W, dtype=jnp.int32)[:, None]
    w_out = jnp.arange(W, dtype=jnp.int32)[None, :]
    B = ((1.0 - fx) * (w_in == w_out + dx0).astype(jnp.float32)
         + fx * (w_in == w_out + dx0 + 1).astype(jnp.float32))
    return B.astype(dtype)


def _build_row_matrix(ty, H, dtype):
    """A[h_out, h_in] (2-banded) - only for the lowering-compat fallback."""
    dy0f = jnp.floor(ty)
    fy = (ty - dy0f).astype(jnp.float32)
    dy0 = dy0f.astype(jnp.int32)
    h_out = jnp.arange(H, dtype=jnp.int32)[:, None]
    h_in = jnp.arange(H, dtype=jnp.int32)[None, :]
    A = ((1.0 - fy) * (h_in == h_out + dy0).astype(jnp.float32)
         + fy * (h_in == h_out + dy0 + 1).astype(jnp.float32))
    return A.astype(dtype)


# ---------------------------------------------------------------------------
# Kernels: one grid step = one chunk of P image planes.
# ---------------------------------------------------------------------------
def _make_hybrid_kernel(H, W, h_off, fold_lanes, mxu_dtype, out_is_int):
    def kernel(si_ref, sf_ref, b_ref, x_ref, o_ref, buf_ref):
        # si_ref: int32[1] SMEM  clamped integer row offset dy
        # sf_ref: f32[1]   SMEM  fractional row weight fy
        # b_ref : (W, W)         resident column interpolation matrix
        # x_ref : (P, H, W)      chunk of input planes
        # o_ref : (P, H*W) or (P, H, W)
        # buf_ref: (P, 3H+16, W) f32 row-padded staging scratch
        P = x_ref.shape[0]
        dy = si_ref[0]
        fy = sf_ref[0]

        # Stage the chunk (as f32) so both vertical taps can be read with
        # in-bounds dynamic sublane slices regardless of dy's sign.
        buf_ref[:, pl.ds(h_off, H), :] = x_ref[...].astype(jnp.float32)

        # 2-tap vertical blend (replaces the old HxH interpolation GEMM).
        # Pad rows of the scratch may hold stale data; the validity mask
        # reproduces exact zero padding for any translation.
        hh = lax.broadcasted_iota(jnp.int32, (H, W), 0)
        y0 = buf_ref[:, pl.ds(h_off + dy, H), :]
        y1 = buf_ref[:, pl.ds(h_off + dy + 1, H), :]
        v0 = (hh + dy >= 0) & (hh + dy < H)
        v1 = (hh + dy + 1 >= 0) & (hh + dy + 1 < H)
        t = ((1.0 - fy) * jnp.where(v0, y0, 0.0)
             + fy * jnp.where(v1, y1, 0.0))                 # (P, H, W) f32

        # Horizontal interpolation: one big GEMM (M = P*H rows) on the MXU.
        out = jnp.dot(t.reshape(P * H, W).astype(mxu_dtype), b_ref[...],
                      preferred_element_type=jnp.float32)   # (P*H, W) f32

        if out_is_int:
            out = jnp.round(out)
        out = out.astype(o_ref.dtype)
        if fold_lanes:
            o_ref[...] = out.reshape(P, H * W)   # lane-dense store (W < 128)
        else:
            o_ref[...] = out.reshape(P, H, W)
    return kernel


def _make_gemm_kernel(fold_lanes, mxu_dtype, out_is_int):
    # Lowering-compat fallback only: dense 2-banded row matrix (A x X x B).
    def kernel(a_ref, b_ref, x_ref, o_ref):
        P, H, W = x_ref.shape
        x = x_ref[...].astype(mxu_dtype)
        a = jnp.broadcast_to(a_ref[...][None], (P,) + a_ref.shape)
        t = jnp.einsum("phk,pkw->phw", a, x,
                       preferred_element_type=jnp.float32)
        out = jnp.dot(t.reshape(P * H, W).astype(mxu_dtype), b_ref[...],
                      preferred_element_type=jnp.float32)
        if out_is_int:
            out = jnp.round(out)
        out = out.astype(o_ref.dtype)
        if fold_lanes:
            o_ref[...] = out.reshape(P, H * W)
        else:
            o_ref[...] = out.reshape(P, H, W)
    return kernel


# ---------------------------------------------------------------------------
# Wrapper
# ---------------------------------------------------------------------------
def translate(x, translation):
    """x: (N, C, H, W), translation: (2,) = (tx, ty) -> (N, C, H, W)."""
    N, C, H, W = x.shape
    NC = N * C
    in_dtype = x.dtype
    out_is_int = bool(jnp.issubdtype(in_dtype, jnp.integer))
    in_itemsize = jnp.dtype(in_dtype).itemsize

    tx = translation[0].astype(jnp.float32)
    ty = translation[1].astype(jnp.float32)

    # bf16 activations keep bf16 MXU operands (v6e/v7x MXU is much faster in
    # bf16); everything else runs the GEMM in f32.
    mxu_dtype = jnp.bfloat16 if in_dtype == jnp.bfloat16 else jnp.float32
    mxu_itemsize = jnp.dtype(mxu_dtype).itemsize

    # Row taps: integer offset + fractional weight. dy is clamped so every
    # dynamic-slice start stays inside the padded scratch; the in-kernel mask
    # gives exact zero padding for arbitrarily large translations.
    dy0 = jnp.floor(ty)
    fy = (ty - dy0).astype(jnp.float32)
    dy_c = jnp.clip(dy0.astype(jnp.int32), -(H + 1), H)
    si = dy_c.reshape(1)                       # int32[1]   -> SMEM
    sf = fy.reshape(1)                         # float32[1] -> SMEM

    Bm = _build_col_matrix(tx, W, mxu_dtype)   # (W, W), resident in VMEM

    if W > 1024:
        # TODO(synk): lane-direction 4-tap shift-and-blend so no O(W^2)
        # matrix is needed for very wide images.
        raise NotImplementedError(
            "translate: W > 1024 needs the shift-and-blend column path; the "
            "resident WxW interpolation matrix would not fit the VMEM budget.")

    vmem_cap, cores = _tpu_vmem_and_cores()
    fold_lanes = W < 128                       # lane-dense stores for narrow W

    per_plane = _footprint_per_plane(H, W, in_itemsize, fold_lanes)
    b_bytes = 2 * _round_up(W, 8) * _round_up(W, 128) * mxu_itemsize
    budget = int(0.30 * vmem_cap)
    avail = budget - b_bytes - (2 << 20)
    if avail < per_plane:
        # TODO(synk): spatial (H) tiling + halo for planes too large for VMEM.
        raise NotImplementedError(
            "translate: a single plane does not fit the VMEM block budget; "
            "spatial tiling is not implemented.")

    # Planes per grid step: as large as the VMEM budget allows; keep >=2
    # chunks only when the part actually has >1 TensorCore.
    P = int(min(NC, max(1, avail // per_plane)))
    if cores >= 2 and NC >= 2:
        P = min(P, pl.cdiv(NC, 2))
    if fold_lanes and P < NC:
        # (8,128) rule for the folded output block's sublane dim.
        P = min(max(8, (P // 8) * 8), NC)

    num_chunks = pl.cdiv(NC, P)                # ragged tail handled by Pallas
    x_flat = x.reshape(NC, H, W)               # free reshape, no HBM copy

    total = P * per_plane + b_bytes + (2 << 20)
    vmem_limit = int(min(max(total + (4 << 20), 24 << 20),
                         int(0.45 * vmem_cap)))

    h_off = H + 8
    hb = 3 * H + 16

    def run(mode, fold, single_buf_b):
        if fold:
            out_shape = jax.ShapeDtypeStruct((NC, H * W), in_dtype)
            out_spec = pl.BlockSpec((P, H * W), lambda i: (i, 0))
        else:
            out_shape = jax.ShapeDtypeStruct((NC, H, W), in_dtype)
            out_spec = pl.BlockSpec((P, H, W), lambda i: (i, 0, 0))
        x_spec = pl.BlockSpec((P, H, W), lambda i: (i, 0, 0))
        if single_buf_b:
            # B's block index is constant across the grid: one buffer suffices.
            b_spec = pl.BlockSpec((W, W), lambda i: (0, 0),
                                  pipeline_mode=pl.Buffered(1))
        else:
            b_spec = pl.BlockSpec((W, W), lambda i: (0, 0))

        if mode == "hybrid":
            kernel = _make_hybrid_kernel(H, W, h_off, fold, mxu_dtype,
                                         out_is_int)
            smem = pl.BlockSpec(memory_space=pltpu.MemorySpace.SMEM)
            in_specs = [smem, smem, b_spec, x_spec]
            operands = (si, sf, Bm, x_flat)
            scratch = [pltpu.VMEM((P, hb, W), jnp.float32)]
            limit = vmem_limit
        else:  # "gemm": lowering-compat fallback
            Am = _build_row_matrix(ty, H, mxu_dtype)
            kernel = _make_gemm_kernel(fold, mxu_dtype, out_is_int)
            a_spec = pl.BlockSpec((H, H), lambda i: (0, 0))
            in_specs = [a_spec, b_spec, x_spec]
            operands = (Am, Bm, x_flat)
            scratch = []
            a_bytes = 2 * _round_up(H, 8) * _round_up(H, 128) * mxu_itemsize
            bcast_a = P * _round_up(H, 8) * _round_up(H, 128) * 4
            limit = int(min(max(total + a_bytes + bcast_a + (4 << 20),
                                32 << 20),
                            int(0.85 * vmem_cap)))

        out = pl.pallas_call(
            kernel,
            out_shape=out_shape,
            grid=(num_chunks,),
            in_specs=in_specs,
            out_specs=out_spec,
            scratch_shapes=scratch,
            compiler_params=pltpu.CompilerParams(
                dimension_semantics=("parallel",),
                vmem_limit_bytes=limit),
        )(*operands)
        return out.reshape(N, C, H, W)

    # Attempt ladder: fastest first, strictly-known-to-lower last.
    attempts = (("hybrid", fold_lanes, True),
                ("hybrid", False, False),
                ("gemm", False, False))
    err = None
    for mode, fold, single_buf in attempts:
        try:
            return run(mode, fold, single_buf)
        except Exception as e:      # lowering/compile failure -> next variant
            err = e
    raise err


# ---------------------------------------------------------------------------
# Pure-JAX reference: grid_sample(bilinear, zeros, align_corners=False) under
# the pure translation produced by this module's theta.
# ---------------------------------------------------------------------------
def translate_ref(x, translation):
    N, C, H, W = x.shape
    tx = translation[0].astype(jnp.float32)
    ty = translation[1].astype(jnp.float32)
    iy = jnp.arange(H, dtype=jnp.float32) + ty     # (H,)
    ix = jnp.arange(W, dtype=jnp.float32) + tx     # (W,)
    y0f = jnp.floor(iy)
    x0f = jnp.floor(ix)
    y0 = y0f.astype(jnp.int32)
    x0 = x0f.astype(jnp.int32)
    y1 = y0 + 1
    x1 = x0 + 1
    wy1 = iy - y0f
    wy0 = 1.0 - wy1
    wx1 = ix - x0f
    wx0 = 1.0 - wx1

    def samp(yi, xi):
        valid = ((yi[:, None] >= 0) & (yi[:, None] < H)
                 & (xi[None, :] >= 0) & (xi[None, :] < W))
        yc = jnp.clip(yi, 0, H - 1)
        xc = jnp.clip(xi, 0, W - 1)
        g = x[:, :, yc, :][:, :, :, xc]            # (N, C, H, W)
        return jnp.where(valid[None, None], g, 0.0)

    out = (wy0[:, None] * wx0[None, :] * samp(y0, x0)
           + wy0[:, None] * wx1[None, :] * samp(y0, x1)
           + wy1[:, None] * wx0[None, :] * samp(y1, x0)
           + wy1[:, None] * wx1[None, :] * samp(y1, x1))
    return out.astype(x.dtype)


if __name__ == "__main__":
    key = jax.random.PRNGKey(0)
    N, C, H, W = 2, 4, 16, 16
    x = jax.random.normal(key, (N, C, H, W), dtype=jnp.float32)

    # Deterministic translation "parameter" (the module's __init__ argument).
    translation = jnp.array([1.5, -2.25], dtype=jnp.float32)  # (tx, ty)

    out = translate(x, translation)
    out = jax.block_until_ready(out)

    ref = translate_ref(x, translation)
    assert out.shape == (N, C, H, W)
    assert jnp.allclose(out, ref, atol=1e-5, rtol=1e-5)

    print("KERNEL_OK")
</pallas_src>

<mosaic_0001>
module attributes {stable_mosaic.version = 11 : i64} {
  func.func @kernel(%arg0: i32, %arg1: memref<1xi32, #tpu.memory_space<smem>>, %arg2: memref<1xf32, #tpu.memory_space<smem>>, %arg3: memref<16x16xf32, #tpu.memory_space<vmem>>, %arg4: memref<8x16x16xf32, #tpu.memory_space<vmem>>, %arg5: memref<8x256xf32, #tpu.memory_space<vmem>>, %arg6: memref<8x64x16xf32, #tpu.memory_space<vmem>>) attributes {dimension_semantics = [#tpu.dimension_semantics<parallel>], iteration_bounds = array<i64: 1>, scalar_prefetch = 0 : i64, scratch_operands = 1 : i64, tpu.core_type = #tpu.core_type<tc>, window_params = [{transform_indices = @transform_0, window_bounds = array<i64: 1>}, {transform_indices = @transform_1, window_bounds = array<i64: 1>}, {pipeline_mode = #tpu.pipeline_mode<synchronous>, transform_indices = @transform_2, window_bounds = array<i64: 16, 16>}, {transform_indices = @transform_3, window_bounds = array<i64: 8, 16, 16>}, {transform_indices = @transform_4, window_bounds = array<i64: 8, 256>}]} {
    %c0 = arith.constant 0 : index
    %0 = memref.load %arg1[%c0] : memref<1xi32, #tpu.memory_space<smem>>
    %c0_0 = arith.constant 0 : index
    %1 = memref.load %arg2[%c0_0] : memref<1xf32, #tpu.memory_space<smem>>
    %c0_1 = arith.constant 0 : index
    %c0_2 = arith.constant 0 : index
    %c0_3 = arith.constant 0 : index
    %2 = vector.load %arg4[%c0_1, %c0_2, %c0_3] : memref<8x16x16xf32, #tpu.memory_space<vmem>>, vector<8x16x16xf32>
    %c0_4 = arith.constant 0 : index
    %c24 = arith.constant 24 : index
    %c0_5 = arith.constant 0 : index
    %3 = vector.load %arg6[%c0_4, %c24, %c0_5] : memref<8x64x16xf32, #tpu.memory_space<vmem>>, vector<8x16x16xf32>
    tpu.vector_store %arg6[%c0_4, %c24, %c0_5], %2 {strides = array<i32>} : memref<8x64x16xf32, #tpu.memory_space<vmem>>, vector<8x16x16xf32>,
    %4 = tpu.iota {dimensions = array<i32: 0>} : vector<16x16xi32>
    %c24_i32 = arith.constant 24 : i32
    %5 = arith.addi %c24_i32, %0 : i32
    %c0_6 = arith.constant 0 : index
    %6 = arith.index_cast %5 : i32 to index
    %c0_7 = arith.constant 0 : index
    %7 = vector.load %arg6[%c0_6, %6, %c0_7] : memref<8x64x16xf32, #tpu.memory_space<vmem>>, vector<8x16x16xf32>
    %c24_i32_8 = arith.constant 24 : i32
    %8 = arith.addi %c24_i32_8, %0 : i32
    %c1_i32 = arith.constant 1 : i32
    %9 = arith.addi %8, %c1_i32 : i32
    %c0_9 = arith.constant 0 : index
    %10 = arith.index_cast %9 : i32 to index
    %c0_10 = arith.constant 0 : index
    %11 = vector.load %arg6[%c0_9, %10, %c0_10] : memref<8x64x16xf32, #tpu.memory_space<vmem>>, vector<8x16x16xf32>
    %12 = vector.broadcast %0 : i32 to vector<16x16xi32>
    %13 = arith.addi %4, %12 : vector<16x16xi32>
    %c0_i32 = arith.constant 0 : i32
    %14 = vector.broadcast %c0_i32 : i32 to vector<16x16xi32>
    %15 = arith.cmpi sge, %13, %14 : vector<16x16xi32>
    %16 = vector.broadcast %0 : i32 to vector<16x16xi32>
    %17 = arith.addi %4, %16 : vector<16x16xi32>
    %c16_i32 = arith.constant 16 : i32
    %18 = vector.broadcast %c16_i32 : i32 to vector<16x16xi32>
    %19 = arith.cmpi slt, %17, %18 : vector<16x16xi32>
    %20 = arith.andi %15, %19 : vector<16x16xi1>
    %21 = vector.broadcast %0 : i32 to vector<16x16xi32>
    %22 = arith.addi %4, %21 : vector<16x16xi32>
    %c1_i32_11 = arith.constant 1 : i32
    %23 = vector.broadcast %c1_i32_11 : i32 to vector<16x16xi32>
    %24 = arith.addi %22, %23 : vector<16x16xi32>
    %c0_i32_12 = arith.constant 0 : i32
    %25 = vector.broadcast %c0_i32_12 : i32 to vector<16x16xi32>
    %26 = arith.cmpi sge, %24, %25 : vector<16x16xi32>
    %27 = vector.broadcast %0 : i32 to vector<16x16xi32>
    %28 = arith.addi %4, %27 : vector<16x16xi32>
    %c1_i32_13 = arith.constant 1 : i32
    %29 = vector.broadcast %c1_i32_13 : i32 to vector<16x16xi32>
    %30 = arith.addi %28, %29 : vector<16x16xi32>
    %c16_i32_14 = arith.constant 16 : i32
    %31 = vector.broadcast %c16_i32_14 : i32 to vector<16x16xi32>
    %32 = arith.cmpi slt, %30, %31 : vector<16x16xi32>
    %33 = arith.andi %26, %32 : vector<16x16xi1>
    %cst = arith.constant 1.000000e+00 : f32
    %34 = arith.subf %cst, %1 : f32
    %cst_15 = arith.constant 0.000000e+00 : f32
    %35 = vector.shape_cast %20 : vector<16x16xi1> to vector<1x16x16xi1>
    %36 = vector.broadcast %35 : vector<1x16x16xi1> to vector<8x16x16xi1>
    %37 = vector.broadcast %cst_15 : f32 to vector<8x16x16xf32>
    %38 = arith.select %36, %7, %37 : vector<8x16x16xi1>, vector<8x16x16xf32>
    %39 = vector.broadcast %34 : f32 to vector<8x16x16xf32>
    %40 = arith.mulf %39, %38 : vector<8x16x16xf32>
    %cst_16 = arith.constant 0.000000e+00 : f32
    %41 = vector.shape_cast %33 : vector<16x16xi1> to vector<1x16x16xi1>
    %42 = vector.broadcast %41 : vector<1x16x16xi1> to vector<8x16x16xi1>
    %43 = vector.broadcast %cst_16 : f32 to vector<8x16x16xf32>
    %44 = arith.select %42, %11, %43 : vector<8x16x16xi1>, vector<8x16x16xf32>
    %45 = vector.broadcast %1 : f32 to vector<8x16x16xf32>
    %46 = arith.mulf %45, %44 : vector<8x16x16xf32>
    %47 = arith.addf %40, %46 : vector<8x16x16xf32>
    %48 = vector.shape_cast %47 : vector<8x16x16xf32> to vector<128x16xf32>
    %c0_17 = arith.constant 0 : index
    %c0_18 = arith.constant 0 : index
    %49 = vector.load %arg3[%c0_17, %c0_18] : memref<16x16xf32, #tpu.memory_space<vmem>>, vector<16x16xf32>
    %cst_19 = arith.constant dense<0.000000e+00> : vector<128x16xf32>
    %50 = tpu.matmul %48, %49, %cst_19 {dimension_numbers = #tpu.dot_dimension_numbers<[1], [0], [0], [1], [0, 0, 1, 1], [], []>} : vector<128x16xf32>, vector<16x16xf32>, vector<128x16xf32> -> vector<128x16xf32>
    %51 = vector.shape_cast %50 : vector<128x16xf32> to vector<8x256xf32>
    %c0_20 = arith.constant 0 : index
    %c0_21 = arith.constant 0 : index
    %52 = vector.load %arg5[%c0_20, %c0_21] : memref<8x256xf32, #tpu.memory_space<vmem>>, vector<8x256xf32>
    tpu.vector_store %arg5[%c0_20, %c0_21], %51 {strides = array<i32>} : memref<8x256xf32, #tpu.memory_space<vmem>>, vector<8x256xf32>,
    return
  }
  func.func @transform_0(%arg0: i32) -> i32 {
    %c0_i32 = arith.constant 0 : i32
    %c0_i32_0 = arith.constant 0 : i32
    return %c0_i32 : i32
  }
  func.func @transform_1(%arg0: i32) -> i32 {
    %c0_i32 = arith.constant 0 : i32
    %c0_i32_0 = arith.constant 0 : i32
    return %c0_i32 : i32
  }
  func.func @transform_2(%arg0: i32) -> (i32, i32) {
    %c0_i32 = arith.constant 0 : i32
    %c0_i32_0 = arith.constant 0 : i32
    %c0_i32_1 = arith.constant 0 : i32
    return %c0_i32, %c0_i32_0 : i32, i32
  }
  func.func @transform_3(%arg0: i32) -> (i32, i32, i32) {
    %c0_i32 = arith.constant 0 : i32
    %c0_i32_0 = arith.constant 0 : i32
    %c0_i32_1 = arith.constant 0 : i32
    return %arg0, %c0_i32, %c0_i32_0 : i32, i32, i32
  }
  func.func @transform_4(%arg0: i32) -> (i32, i32) {
    %c0_i32 = arith.constant 0 : i32
    %c0_i32_0 = arith.constant 0 : i32
    return %arg0, %c0_i32 : i32, i32
  }
}

module attributes {stable_mosaic.version = 11 : i64} {
  func.func @kernel(%arg0: i32, %arg1: memref<1xi32, #tpu.memory_space<smem>>, %arg2: memref<1xf32, #tpu.memory_space<smem>>, %arg3: memref<16x16xf32, #tpu.memory_space<vmem>>, %arg4: memref<8x16x16xf32, #tpu.memory_space<vmem>>, %arg5: memref<8x16x16xf32, #tpu.memory_space<vmem>>, %arg6: memref<8x64x16xf32, #tpu.memory_space<vmem>>) attributes {dimension_semantics = [#tpu.dimension_semantics<parallel>], iteration_bounds = array<i64: 1>, scalar_prefetch = 0 : i64, scratch_operands = 1 : i64, tpu.core_type = #tpu.core_type<tc>, window_params = [{transform_indices = @transform_0, window_bounds = array<i64: 1>}, {transform_indices = @transform_1, window_bounds = array<i64: 1>}, {pipeline_mode = #tpu.pipeline_mode<synchronous>, transform_indices = @transform_2, window_bounds = array<i64: 16, 16>}, {transform_indices = @transform_3, window_bounds = array<i64: 8, 16, 16>}, {transform_indices = @transform_4, window_bounds = array<i64: 8, 16, 16>}]} {
    %c0 = arith.constant 0 : index
    %0 = memref.load %arg1[%c0] : memref<1xi32, #tpu.memory_space<smem>>
    %c0_0 = arith.constant 0 : index
    %1 = memref.load %arg2[%c0_0] : memref<1xf32, #tpu.memory_space<smem>>
    %c0_1 = arith.constant 0 : index
    %c0_2 = arith.constant 0 : index
    %c0_3 = arith.constant 0 : index
    %2 = vector.load %arg4[%c0_1, %c0_2, %c0_3] : memref<8x16x16xf32, #tpu.memory_space<vmem>>, vector<8x16x16xf32>
    %c0_4 = arith.constant 0 : index
    %c24 = arith.constant 24 : index
    %c0_5 = arith.constant 0 : index
    %3 = vector.load %arg6[%c0_4, %c24, %c0_5] : memref<8x64x16xf32, #tpu.memory_space<vmem>>, vector<8x16x16xf32>
    tpu.vector_store %arg6[%c0_4, %c24, %c0_5], %2 {strides = array<i32>} : memref<8x64x16xf32, #tpu.memory_space<vmem>>, vector<8x16x16xf32>,
    %4 = tpu.iota {dimensions = array<i32: 0>} : vector<16x16xi32>
    %c24_i32 = arith.constant 24 : i32
    %5 = arith.addi %c24_i32, %0 : i32
    %c0_6 = arith.constant 0 : index
    %6 = arith.index_cast %5 : i32 to index
    %c0_7 = arith.constant 0 : index
    %7 = vector.load %arg6[%c0_6, %6, %c0_7] : memref<8x64x16xf32, #tpu.memory_space<vmem>>, vector<8x16x16xf32>
    %c24_i32_8 = arith.constant 24 : i32
    %8 = arith.addi %c24_i32_8, %0 : i32
    %c1_i32 = arith.constant 1 : i32
    %9 = arith.addi %8, %c1_i32 : i32
    %c0_9 = arith.constant 0 : index
    %10 = arith.index_cast %9 : i32 to index
    %c0_10 = arith.constant 0 : index
    %11 = vector.load %arg6[%c0_9, %10, %c0_10] : memref<8x64x16xf32, #tpu.memory_space<vmem>>, vector<8x16x16xf32>
    %12 = vector.broadcast %0 : i32 to vector<16x16xi32>
    %13 = arith.addi %4, %12 : vector<16x16xi32>
    %c0_i32 = arith.constant 0 : i32
    %14 = vector.broadcast %c0_i32 : i32 to vector<16x16xi32>
    %15 = arith.cmpi sge, %13, %14 : vector<16x16xi32>
    %16 = vector.broadcast %0 : i32 to vector<16x16xi32>
    %17 = arith.addi %4, %16 : vector<16x16xi32>
    %c16_i32 = arith.constant 16 : i32
    %18 = vector.broadcast %c16_i32 : i32 to vector<16x16xi32>
    %19 = arith.cmpi slt, %17, %18 : vector<16x16xi32>
    %20 = arith.andi %15, %19 : vector<16x16xi1>
    %21 = vector.broadcast %0 : i32 to vector<16x16xi32>
    %22 = arith.addi %4, %21 : vector<16x16xi32>
    %c1_i32_11 = arith.constant 1 : i32
    %23 = vector.broadcast %c1_i32_11 : i32 to vector<16x16xi32>
    %24 = arith.addi %22, %23 : vector<16x16xi32>
    %c0_i32_12 = arith.constant 0 : i32
    %25 = vector.broadcast %c0_i32_12 : i32 to vector<16x16xi32>
    %26 = arith.cmpi sge, %24, %25 : vector<16x16xi32>
    %27 = vector.broadcast %0 : i32 to vector<16x16xi32>
    %28 = arith.addi %4, %27 : vector<16x16xi32>
    %c1_i32_13 = arith.constant 1 : i32
    %29 = vector.broadcast %c1_i32_13 : i32 to vector<16x16xi32>
    %30 = arith.addi %28, %29 : vector<16x16xi32>
    %c16_i32_14 = arith.constant 16 : i32
    %31 = vector.broadcast %c16_i32_14 : i32 to vector<16x16xi32>
    %32 = arith.cmpi slt, %30, %31 : vector<16x16xi32>
    %33 = arith.andi %26, %32 : vector<16x16xi1>
    %cst = arith.constant 1.000000e+00 : f32
    %34 = arith.subf %cst, %1 : f32
    %cst_15 = arith.constant 0.000000e+00 : f32
    %35 = vector.shape_cast %20 : vector<16x16xi1> to vector<1x16x16xi1>
    %36 = vector.broadcast %35 : vector<1x16x16xi1> to vector<8x16x16xi1>
    %37 = vector.broadcast %cst_15 : f32 to vector<8x16x16xf32>
    %38 = arith.select %36, %7, %37 : vector<8x16x16xi1>, vector<8x16x16xf32>
    %39 = vector.broadcast %34 : f32 to vector<8x16x16xf32>
    %40 = arith.mulf %39, %38 : vector<8x16x16xf32>
    %cst_16 = arith.constant 0.000000e+00 : f32
    %41 = vector.shape_cast %33 : vector<16x16xi1> to vector<1x16x16xi1>
    %42 = vector.broadcast %41 : vector<1x16x16xi1> to vector<8x16x16xi1>
    %43 = vector.broadcast %cst_16 : f32 to vector<8x16x16xf32>
    %44 = arith.select %42, %11, %43 : vector<8x16x16xi1>, vector<8x16x16xf32>
    %45 = vector.broadcast %1 : f32 to vector<8x16x16xf32>
    %46 = arith.mulf %45, %44 : vector<8x16x16xf32>
    %47 = arith.addf %40, %46 : vector<8x16x16xf32>
    %48 = vector.shape_cast %47 : vector<8x16x16xf32> to vector<128x16xf32>
    %c0_17 = arith.constant 0 : index
    %c0_18 = arith.constant 0 : index
    %49 = vector.load %arg3[%c0_17, %c0_18] : memref<16x16xf32, #tpu.memory_space<vmem>>, vector<16x16xf32>
    %cst_19 = arith.constant dense<0.000000e+00> : vector<128x16xf32>
    %50 = tpu.matmul %48, %49, %cst_19 {dimension_numbers = #tpu.dot_dimension_numbers<[1], [0], [0], [1], [0, 0, 1, 1], [], []>} : vector<128x16xf32>, vector<16x16xf32>, vector<128x16xf32> -> vector<128x16xf32>
    %51 = vector.shape_cast %50 : vector<128x16xf32> to vector<8x16x16xf32>
    %c0_20 = arith.constant 0 : index
    %c0_21 = arith.constant 0 : index
    %c0_22 = arith.constant 0 : index
    %52 = vector.load %arg5[%c0_20, %c0_21, %c0_22] : memref<8x16x16xf32, #tpu.memory_space<vmem>>, vector<8x16x16xf32>
    tpu.vector_store %arg5[%c0_20, %c0_21, %c0_22], %51 {strides = array<i32>} : memref<8x16x16xf32, #tpu.memory_space<vmem>>, vector<8x16x16xf32>,
    return
  }
  func.func @transform_0(%arg0: i32) -> i32 {
    %c0_i32 = arith.constant 0 : i32
    %c0_i32_0 = arith.constant 0 : i32
    return %c0_i32 : i32
  }
  func.func @transform_1(%arg0: i32) -> i32 {
    %c0_i32 = arith.constant 0 : i32
    %c0_i32_0 = arith.constant 0 : i32
    return %c0_i32 : i32
  }
  func.func @transform_2(%arg0: i32) -> (i32, i32) {
    %c0_i32 = arith.constant 0 : i32
    %c0_i32_0 = arith.constant 0 : i32
    %c0_i32_1 = arith.constant 0 : i32
    return %c0_i32, %c0_i32_0 : i32, i32
  }
  func.func @transform_3(%arg0: i32) -> (i32, i32, i32) {
    %c0_i32 = arith.constant 0 : i32
    %c0_i32_0 = arith.constant 0 : i32
    %c0_i32_1 = arith.constant 0 : i32
    return %arg0, %c0_i32, %c0_i32_0 : i32, i32, i32
  }
  func.func @transform_4(%arg0: i32) -> (i32, i32, i32) {
    %c0_i32 = arith.constant 0 : i32
    %c0_i32_0 = arith.constant 0 : i32
    %c0_i32_1 = arith.constant 0 : i32
    return %arg0, %c0_i32, %c0_i32_0 : i32, i32, i32
  }
}

module attributes {stable_mosaic.version = 11 : i64} {
  func.func @kernel(%arg0: i32, %arg1: memref<16x16xf32, #tpu.memory_space<vmem>>, %arg2: memref<16x16xf32, #tpu.memory_space<vmem>>, %arg3: memref<8x16x16xf32, #tpu.memory_space<vmem>>, %arg4: memref<8x16x16xf32, #tpu.memory_space<vmem>>) attributes {dimension_semantics = [#tpu.dimension_semantics<parallel>], iteration_bounds = array<i64: 1>, scalar_prefetch = 0 : i64, scratch_operands = 0 : i64, tpu.core_type = #tpu.core_type<tc>, window_params = [{pipeline_mode = #tpu.pipeline_mode<synchronous>, transform_indices = @transform_0, window_bounds = array<i64: 16, 16>}, {pipeline_mode = #tpu.pipeline_mode<synchronous>, transform_indices = @transform_1, window_bounds = array<i64: 16, 16>}, {transform_indices = @transform_2, window_bounds = array<i64: 8, 16, 16>}, {transform_indices = @transform_3, window_bounds = array<i64: 8, 16, 16>}]} {
    %c0 = arith.constant 0 : index
    %c0_0 = arith.constant 0 : index
    %c0_1 = arith.constant 0 : index
    %0 = vector.load %arg3[%c0, %c0_0, %c0_1] : memref<8x16x16xf32, #tpu.memory_space<vmem>>, vector<8x16x16xf32>
    %c0_2 = arith.constant 0 : index
    %c0_3 = arith.constant 0 : index
    %1 = vector.load %arg1[%c0_2, %c0_3] : memref<16x16xf32, #tpu.memory_space<vmem>>, vector<16x16xf32>
    %2 = vector.shape_cast %1 : vector<16x16xf32> to vector<1x16x16xf32>
    %3 = vector.shape_cast %2 : vector<1x16x16xf32> to vector<1x16x16xf32>
    %4 = vector.broadcast %3 : vector<1x16x16xf32> to vector<8x16x16xf32>
    "tpu.trace_start"() <{level = 10 : i32, message = "phk,pkw->phw"}> : () -> ()
    %cst = arith.constant dense<0.000000e+00> : vector<8x16x16xf32>
    %5 = tpu.matmul %4, %0, %cst {dimension_numbers = #tpu.dot_dimension_numbers<[2], [1], [1], [2], [0, 0, 0, 1, 1, 2], [0], [0]>} : vector<8x16x16xf32>, vector<8x16x16xf32>, vector<8x16x16xf32> -> vector<8x16x16xf32>
    "tpu.trace_stop"() : () -> ()
    %6 = vector.shape_cast %5 : vector<8x16x16xf32> to vector<128x16xf32>
    %c0_4 = arith.constant 0 : index
    %c0_5 = arith.constant 0 : index
    %7 = vector.load %arg2[%c0_4, %c0_5] : memref<16x16xf32, #tpu.memory_space<vmem>>, vector<16x16xf32>
    %cst_6 = arith.constant dense<0.000000e+00> : vector<128x16xf32>
    %8 = tpu.matmul %6, %7, %cst_6 {dimension_numbers = #tpu.dot_dimension_numbers<[1], [0], [0], [1], [0, 0, 1, 1], [], []>} : vector<128x16xf32>, vector<16x16xf32>, vector<128x16xf32> -> vector<128x16xf32>
    %9 = vector.shape_cast %8 : vector<128x16xf32> to vector<8x16x16xf32>
    %c0_7 = arith.constant 0 : index
    %c0_8 = arith.constant 0 : index
    %c0_9 = arith.constant 0 : index
    %10 = vector.load %arg4[%c0_7, %c0_8, %c0_9] : memref<8x16x16xf32, #tpu.memory_space<vmem>>, vector<8x16x16xf32>
    tpu.vector_store %arg4[%c0_7, %c0_8, %c0_9], %9 {strides = array<i32>} : memref<8x16x16xf32, #tpu.memory_space<vmem>>, vector<8x16x16xf32>,
    return
  }
  func.func @transform_0(%arg0: i32) -> (i32, i32) {
    %c0_i32 = arith.constant 0 : i32
    %c0_i32_0 = arith.constant 0 : i32
    %c0_i32_1 = arith.constant 0 : i32
    return %c0_i32, %c0_i32_0 : i32, i32
  }
  func.func @transform_1(%arg0: i32) -> (i32, i32) {
    %c0_i32 = arith.constant 0 : i32
    %c0_i32_0 = arith.constant 0 : i32
    %c0_i32_1 = arith.constant 0 : i32
    return %c0_i32, %c0_i32_0 : i32, i32
  }
  func.func @transform_2(%arg0: i32) -> (i32, i32, i32) {
    %c0_i32 = arith.constant 0 : i32
    %c0_i32_0 = arith.constant 0 : i32
    %c0_i32_1 = arith.constant 0 : i32
    return %arg0, %c0_i32, %c0_i32_0 : i32, i32, i32
  }
  func.func @transform_3(%arg0: i32) -> (i32, i32, i32) {
    %c0_i32 = arith.constant 0 : i32
    %c0_i32_0 = arith.constant 0 : i32
    %c0_i32_1 = arith.constant 0 : i32
    return %arg0, %c0_i32, %c0_i32_0 : i32, i32, i32
  }
}

</mosaic_0001>

<llo_original>
// kernel: tpu_custom_call.1
$region0: #{tpu_custom_call.1}
  #allocation0 [shape = 'u32[]', space=smem, size = 0x4, offset = 0x4, fixed_abs, tag = 'smem constant byte address 0x4 - core index']
  #allocation1 [shape = 'u32[72,128]{1,0:T(1,128)}', space=vmem, size = 0x9000, scoped, tag = 'internal scratch']
  #allocation2 [shape = 'f32[8,64,16]{2,1,0:T(8,128)}', space=vmem, size = 0x40000, scoped, tag = 'scratch operand']
  #allocation3 [shape = 's32[1]{0:T(128)S(6)}', space=smem, size = 0x200, scoped, tag = 'scoped memory for tpu_custom_call.1']
  #allocation4 [shape = 'f32[1]{0:T(128)S(6)}', space=smem, size = 0x200, scoped, tag = 'scoped memory for tpu_custom_call.1']
  %s0 = inlined_call_operand.<no memory space> [shape: s32[1], index: 0, kind: input, shape index: {}]
  %s1 = inlined_call_operand.<no memory space> [shape: f32[1], index: 1, kind: input, shape index: {}]
  %s2 = inlined_call_operand.hbm [shape: f32[16,16], index: 2, kind: input, shape index: {}]
  %s3 = inlined_call_operand.hbm [shape: f32[8,16,16], index: 3, kind: input, shape index: {}]
  %s4 = inlined_call_operand.hbm [shape: f32[8,16,16], index: 4, kind: output, shape index: {}]
  %s5 = sld [smem:[#allocation0]]
  $region34: #{tpu_custom_call.1} parent=0
    _
  %s7 = ssub.s32 1, %s5
  %s8 = scalar_select 0, %s7, %s5
  %9 = sst [smem:[#allocation3]] %s0
  %10 = sst [smem:[#allocation4]] %s1
  $region1: #{tpu_custom_call.1} parent=0
    #allocation5 [shape = 'u8[8192]{0}', space=vmem, size = 0x2000, scoped, tag = 'input window, operand 2, single buffered']
    #allocation6 [shape = 's32[1]{0}', space=sflag, size = 0x4, scoped, tag = 'scoped memory for tpu_custom_call.1']
    #allocation7 [shape = 's32[1]{0}', space=sflag, size = 0x4, scoped, tag = 'scoped memory for tpu_custom_call.1']
    #allocation8 [shape = 'u8[65536]{0}', space=vmem, size = 0x10000, scoped, tag = 'input window, operand 3, single buffered']
    #allocation9 [shape = 's32[1]{0}', space=sflag, size = 0x4, scoped, tag = 'scoped memory for tpu_custom_call.1']
    #allocation10 [shape = 'u8[65536]{0}', space=vmem, size = 0x10000, scoped, tag = 'output window, operand 0, single buffered']
    %11 = vsyncpa [#allocation6], 0
    %12 = vsyncpa [#allocation9], 0
    %13 = vsyncpa [#allocation7], 0
    // Predicated region
    $region2: #{tpu_custom_call.1} parent=1 // pred_check
      _
    $region3: #{tpu_custom_call.1} parent=1 // pred_check_branch
      %15 = sbr.rel (0) target = $region5
    $region4: #{tpu_custom_call.1} parent=1 // pred_region
      _
    $region5: #{tpu_custom_call.1} parent=1 // pred_fallthru
      _
    // Predicated region
    $region6: #{tpu_custom_call.1} parent=1 // pred_check
      _
    $region7: #{tpu_custom_call.1} parent=1 // pred_check_branch
      %17 = sbr.rel (0) target = $region9
    $region8: #{tpu_custom_call.1} parent=1 // pred_region
      _
    $region9: #{tpu_custom_call.1} parent=1 // pred_fallthru
      _
    // Predicated region
    $region10: #{tpu_custom_call.1} parent=1 // pred_check
      _
    $region11: #{tpu_custom_call.1} parent=1 // pred_check_branch
      %19 = sbr.rel (0) target = $region13
    $region12: #{tpu_custom_call.1} parent=1 // pred_region
      %21 = vsyncadd [#allocation6], 0
      %s22 = sshll.u32 %s2, 4
      %s23 = int_to_ptr.hbm [resolvable:$true] %s22
      %s24 = sshll.u32 [#allocation5], 4
      %s25 = int_to_ptr.vmem [resolvable:$true] %s24
      %30 = dma.hbm_to_vmem [thread:$0]  %s23, 256, %s25, [#allocation6], 128, 128, 8
    $region13: #{tpu_custom_call.1} parent=1 // pred_fallthru
      _
    // Predicated region
    $region14: #{tpu_custom_call.1} parent=1 // pred_check
      _
    $region15: #{tpu_custom_call.1} parent=1 // pred_check_branch
      %32 = sbr.rel (0) target = $region17
    $region16: #{tpu_custom_call.1} parent=1 // pred_region
      %34 = vsyncadd [#allocation9], 0
      %s35 = sshll.u32 %s3, 4
      %s36 = int_to_ptr.hbm [resolvable:$true] %s35
      %s37 = sshll.u32 [#allocation8], 4
      %s38 = int_to_ptr.vmem [resolvable:$true] %s37
      %43 = dma.hbm_to_vmem [thread:$0]  %s36, 2048, %s38, [#allocation9], 128, 128, 8
    $region17: #{tpu_custom_call.1} parent=1 // pred_fallthru
      _
    // Predicated region
    $region18: #{tpu_custom_call.1} parent=1 // pred_check
      _
    $region19: #{tpu_custom_call.1} parent=1 // pred_check_branch
      %45 = sbr.rel (0) target = $region21
    $region20: #{tpu_custom_call.1} parent=1 // pred_region
      %47 = dma.done [#allocation6], 256
    $region21: #{tpu_custom_call.1} parent=1 // pred_fallthru
      _
    // Predicated region
    $region22: #{tpu_custom_call.1} parent=1 // pred_check
      _
    $region23: #{tpu_custom_call.1} parent=1 // pred_check_branch
      %49 = sbr.rel (0) target = $region25
    $region24: #{tpu_custom_call.1} parent=1 // pred_region
      %51 = dma.done [#allocation9], 2048
    $region25: #{tpu_custom_call.1} parent=1 // pred_fallthru
      _
    %s52 = sld [smem:[#allocation3]]
    %s53 = sld [smem:[#allocation4]]
    %v54 = vld [vmem:[#allocation8] sm:$0xff]
    %v55 = vld [vmem:[#allocation8 + $0x8] sm:$0xff]
    %v56 = vld [vmem:[#allocation8 + $0x10] sm:$0xff]
    %v57 = vld [vmem:[#allocation8 + $0x18] sm:$0xff]
    %v58 = vld [vmem:[#allocation8 + $0x20] sm:$0xff]
    %v59 = vld [vmem:[#allocation8 + $0x28] sm:$0xff]
    %v60 = vld [vmem:[#allocation8 + $0x30] sm:$0xff]
    %v61 = vld [vmem:[#allocation8 + $0x38] sm:$0xff]
    %v62 = vld [vmem:[#allocation8 + $0x40] sm:$0xff]
    %v63 = vld [vmem:[#allocation8 + $0x48] sm:$0xff]
    %v64 = vld [vmem:[#allocation8 + $0x50] sm:$0xff]
    %v65 = vld [vmem:[#allocation8 + $0x58] sm:$0xff]
    %v66 = vld [vmem:[#allocation8 + $0x60] sm:$0xff]
    %v67 = vld [vmem:[#allocation8 + $0x68] sm:$0xff]
    %v68 = vld [vmem:[#allocation8 + $0x70] sm:$0xff]
    %v69 = vld [vmem:[#allocation8 + $0x78] sm:$0xff]
    %vm70 = vcmask 130048
    %71 = vst.msk [vmem:[#allocation2 + $0x18] sm:$0xff] %vm70, %v54
    %72 = vst.msk [vmem:[#allocation2 + $0x20] sm:$0xff] %vm70, %v55
    %73 = vst.msk [vmem:[#allocation2 + $0x58] sm:$0xff] %vm70, %v56
    %74 = vst.msk [vmem:[#allocation2 + $0x60] sm:$0xff] %vm70, %v57
    %75 = vst.msk [vmem:[#allocation2 + $0x98] sm:$0xff] %vm70, %v58
    %76 = vst.msk [vmem:[#allocation2 + $0xa0] sm:$0xff] %vm70, %v59
    %77 = vst.msk [vmem:[#allocation2 + $0xd8] sm:$0xff] %vm70, %v60
    %78 = vst.msk [vmem:[#allocation2 + $0xe0] sm:$0xff] %vm70, %v61
    %79 = vst.msk [vmem:[#allocation2 + $0x118] sm:$0xff] %vm70, %v62
    %80 = vst.msk [vmem:[#allocation2 + $0x120] sm:$0xff] %vm70, %v63
    %81 = vst.msk [vmem:[#allocation2 + $0x158] sm:$0xff] %vm70, %v64
    %82 = vst.msk [vmem:[#allocation2 + $0x160] sm:$0xff] %vm70, %v65
    %83 = vst.msk [vmem:[#allocation2 + $0x198] sm:$0xff] %vm70, %v66
    %84 = vst.msk [vmem:[#allocation2 + $0x1a0] sm:$0xff] %vm70, %v67
    %85 = vst.msk [vmem:[#allocation2 + $0x1d8] sm:$0xff] %vm70, %v68
    %86 = vst.msk [vmem:[#allocation2 + $0x1e0] sm:$0xff] %vm70, %v69
    %v87 = vlaneseq
    %v88 = vshrl.u32 %v87, 7
    %v89 = vadd.s32 %v88, 8
    %s90 = sadd.s32 %s52, 24
    %s91 = scalar_lea.vmem [#allocation2], %s90
    %v92 = vld [vmem:[%s91] sm:$0xff]
    %v93 = vld [vmem:[%s91 + $0x8] sm:$0xff]
    %v94 = vld [vmem:[%s91 + $0x40] sm:$0xff]
    %v95 = vld [vmem:[%s91 + $0x48] sm:$0xff]
    %v96 = vld [vmem:[%s91 + $0x80] sm:$0xff]
    %v97 = vld [vmem:[%s91 + $0x88] sm:$0xff]
    %v98 = vld [vmem:[%s91 + $0xc0] sm:$0xff]
    %v99 = vld [vmem:[%s91 + $0xc8] sm:$0xff]
    %v100 = vld [vmem:[%s91 + $0x100] sm:$0xff]
    %v101 = vld [vmem:[%s91 + $0x108] sm:$0xff]
    %v102 = vld [vmem:[%s91 + $0x140] sm:$0xff]
    %v103 = vld [vmem:[%s91 + $0x148] sm:$0xff]
    %v104 = vld [vmem:[%s91 + $0x180] sm:$0xff]
    %v105 = vld [vmem:[%s91 + $0x188] sm:$0xff]
    %v106 = vld [vmem:[%s91 + $0x1c0] sm:$0xff]
    %v107 = vld [vmem:[%s91 + $0x1c8] sm:$0xff]
    %s108 = sadd.s32 %s52, 25
    %s109 = scalar_lea.vmem [#allocation2], %s108
    %v110 = vld [vmem:[%s109] sm:$0xff]
    %v111 = vld [vmem:[%s109 + $0x8] sm:$0xff]
    %v112 = vld [vmem:[%s109 + $0x40] sm:$0xff]
    %v113 = vld [vmem:[%s109 + $0x48] sm:$0xff]
    %v114 = vld [vmem:[%s109 + $0x80] sm:$0xff]
    %v115 = vld [vmem:[%s109 + $0x88] sm:$0xff]
    %v116 = vld [vmem:[%s109 + $0xc0] sm:$0xff]
    %v117 = vld [vmem:[%s109 + $0xc8] sm:$0xff]
    %v118 = vld [vmem:[%s109 + $0x100] sm:$0xff]
    %v119 = vld [vmem:[%s109 + $0x108] sm:$0xff]
    %v120 = vld [vmem:[%s109 + $0x140] sm:$0xff]
    %v121 = vld [vmem:[%s109 + $0x148] sm:$0xff]
    %v122 = vld [vmem:[%s109 + $0x180] sm:$0xff]
    %v123 = vld [vmem:[%s109 + $0x188] sm:$0xff]
    %v124 = vld [vmem:[%s109 + $0x1c0] sm:$0xff]
    %v125 = vld [vmem:[%s109 + $0x1c8] sm:$0xff]
    %v126 = vstv %s52
    %v127 = vadd.s32 %v88, %v126
    %v128 = vadd.s32 %v89, %v126
    %vm129 = vcmp.ge.s32.totalorder %v127, 0
    %vm130 = vcmp.ge.s32.totalorder %v128, 0
    %vm131 = vcmp.lt.s32.totalorder %v127, 16
    %vm132 = vcmp.lt.s32.totalorder %v128, 16
    %vm133 = vmand %vm129, %vm131
    %vm134 = vmand %vm130, %vm132
    %v135 = vadd.s32 %v127, 1
    %v136 = vadd.s32 %v128, 1
    %vm137 = vcmp.ge.s32.totalorder %v135, 0
    %vm138 = vcmp.ge.s32.totalorder %v136, 0
    %vm139 = vcmp.lt.s32.totalorder %v135, 16
    %vm140 = vcmp.lt.s32.totalorder %v136, 16
    %vm141 = vmand %vm137, %vm139
    %vm142 = vmand %vm138, %vm140
    %s143 = ssub.f32 1.0, %s53
    %v144 = vsel %vm133, 1, 0
    %v145 = vsel %vm134, 1, 0
    %vm146 = vcmp.eq.s32.totalorder %v144, 1
    %vm147 = vcmp.eq.s32.totalorder %v145, 1
    %v148 = vsel %vm146, %v92, 0.0
    %v149 = vsel %vm147, %v93, 0.0
    %v150 = vsel %vm146, %v94, 0.0
    %v151 = vsel %vm147, %v95, 0.0
    %v152 = vsel %vm146, %v96, 0.0
    %v153 = vsel %vm147, %v97, 0.0
    %v154 = vsel %vm146, %v98, 0.0
    %v155 = vsel %vm147, %v99, 0.0
    %v156 = vsel %vm146, %v100, 0.0
    %v157 = vsel %vm147, %v101, 0.0
    %v158 = vsel %vm146, %v102, 0.0
    %v159 = vsel %vm147, %v103, 0.0
    %v160 = vsel %vm146, %v104, 0.0
    %v161 = vsel %vm147, %v105, 0.0
    %v162 = vsel %vm146, %v106, 0.0
    %v163 = vsel %vm147, %v107, 0.0
    %v164 = vstv %s143
    %v165 = vmul.f32 %v164, %v148
    %v166 = vmul.f32 %v164, %v149
    %v167 = vmul.f32 %v164, %v150
    %v168 = vmul.f32 %v164, %v151
    %v169 = vmul.f32 %v164, %v152
    %v170 = vmul.f32 %v164, %v153
    %v171 = vmul.f32 %v164, %v154
    %v172 = vmul.f32 %v164, %v155
    %v173 = vmul.f32 %v164, %v156
    %v174 = vmul.f32 %v164, %v157
    %v175 = vmul.f32 %v164, %v158
    %v176 = vmul.f32 %v164, %v159
    %v177 = vmul.f32 %v164, %v160
    %v178 = vmul.f32 %v164, %v161
    %v179 = vmul.f32 %v164, %v162
    %v180 = vmul.f32 %v164, %v163
    %v181 = vsel %vm141, 1, 0
    %v182 = vsel %vm142, 1, 0
    %vm183 = vcmp.eq.s32.totalorder %v181, 1
    %vm184 = vcmp.eq.s32.totalorder %v182, 1
    %v185 = vsel %vm183, %v110, 0.0
    %v186 = vsel %vm184, %v111, 0.0
    %v187 = vsel %vm183, %v112, 0.0
    %v188 = vsel %vm184, %v113, 0.0
    %v189 = vsel %vm183, %v114, 0.0
    %v190 = vsel %vm184, %v115, 0.0
    %v191 = vsel %vm183, %v116, 0.0
    %v192 = vsel %vm184, %v117, 0.0
    %v193 = vsel %vm183, %v118, 0.0
    %v194 = vsel %vm184, %v119, 0.0
    %v195 = vsel %vm183, %v120, 0.0
    %v196 = vsel %vm184, %v121, 0.0
    %v197 = vsel %vm183, %v122, 0.0
    %v198 = vsel %vm184, %v123, 0.0
    %v199 = vsel %vm183, %v124, 0.0
    %v200 = vsel %vm184, %v125, 0.0
    %v201 = vstv %s53
    %v202 = vmul.f32 %v201, %v185
    %v203 = vmul.f32 %v201, %v186
    %v204 = vmul.f32 %v201, %v187
    %v205 = vmul.f32 %v201, %v188
    %v206 = vmul.f32 %v201, %v189
    %v207 = vmul.f32 %v201, %v190
    %v208 = vmul.f32 %v201, %v191
    %v209 = vmul.f32 %v201, %v192
    %v210 = vmul.f32 %v201, %v193
    %v211 = vmul.f32 %v201, %v194
    %v212 = vmul.f32 %v201, %v195
    %v213 = vmul.f32 %v201, %v196
    %v214 = vmul.f32 %v201, %v197
    %v215 = vmul.f32 %v201, %v198
    %v216 = vmul.f32 %v201, %v199
    %v217 = vmul.f32 %v201, %v200
    %v218 = vadd.f32 %v165, %v202
    %v219 = vadd.f32 %v166, %v203
    %v220 = vadd.f32 %v167, %v204
    %v221 = vadd.f32 %v168, %v205
    %v222 = vadd.f32 %v169, %v206
    %v223 = vadd.f32 %v170, %v207
    %v224 = vadd.f32 %v171, %v208
    %v225 = vadd.f32 %v172, %v209
    %v226 = vadd.f32 %v173, %v210
    %v227 = vadd.f32 %v174, %v211
    %v228 = vadd.f32 %v175, %v212
    %v229 = vadd.f32 %v176, %v213
    %v230 = vadd.f32 %v177, %v214
    %v231 = vadd.f32 %v178, %v215
    %v232 = vadd.f32 %v179, %v216
    %v233 = vadd.f32 %v180, %v217
    %v234 = vld [vmem:[#allocation5] sm:$0xff]
    %v235 = vld [vmem:[#allocation5 + $0x8] sm:$0xff]
    %v237 = vsel %vm70, %v218, 0
    %v240 = vsel %vm70, %v219, 0
    %v243 = vsel %vm70, %v220, 0
    %v246 = vsel %vm70, %v221, 0
    %v249 = vsel %vm70, %v222, 0
    %v252 = vsel %vm70, %v223, 0
    %v255 = vsel %vm70, %v224, 0
    %v258 = vsel %vm70, %v225, 0
    %v261 = vsel %vm70, %v226, 0
    %v264 = vsel %vm70, %v227, 0
    %v267 = vsel %vm70, %v228, 0
    %v270 = vsel %vm70, %v229, 0
    %v273 = vsel %vm70, %v230, 0
    %v276 = vsel %vm70, %v231, 0
    %v279 = vsel %vm70, %v232, 0
    %v282 = vsel %vm70, %v233, 0
    %284 = vmatpush.msra.mxu0 0.0
    %285 = vmatpush.msra.mxu0 0.0
    %286 = vmatpush.msra.mxu0 0.0
    %287 = vmatpush.msra.mxu0 0.0
    %288 = vmatpush.msra.mxu0 0.0
    %289 = vmatpush.msra.mxu0 0.0
    %290 = vmatpush.msra.mxu0 0.0
    %291 = vmatpush.msra.mxu0 0.0
    %292 = vmatpush.msra.mxu0 0.0
    %293 = vmatpush.msra.mxu0 0.0
    %294 = vmatpush.msra.mxu0 0.0
    %295 = vmatpush.msra.mxu0 0.0
    %296 = vmatpush.msra.mxu0 0.0
    %297 = vmatpush.msra.mxu0 0.0
    %298 = vmatpush.msra.mxu0 %v235
    %299 = vmatpush.msra.mxu0 %v234
    %300 = vmatmul.f32.gmra.mxu0 %v237
    %v301 = vpop.f32.mrf.mxu0
    %v302 = vadd.f32 0.0, %v301
    %303 = vmatmul.f32.gmra.mxu0 %v240
    %v304 = vpop.f32.mrf.mxu0
    %v305 = vadd.f32 0.0, %v304
    %306 = vmatmul.f32.gmra.mxu0 %v243
    %v307 = vpop.f32.mrf.mxu0
    %v308 = vadd.f32 0.0, %v307
    %309 = vmatmul.f32.gmra.mxu0 %v246
    %v310 = vpop.f32.mrf.mxu0
    %v311 = vadd.f32 0.0, %v310
    %312 = vmatmul.f32.gmra.mxu0 %v249
    %v313 = vpop.f32.mrf.mxu0
    %v314 = vadd.f32 0.0, %v313
    %315 = vmatmul.f32.gmra.mxu0 %v252
    %v316 = vpop.f32.mrf.mxu0
    %v317 = vadd.f32 0.0, %v316
    %318 = vmatmul.f32.gmra.mxu0 %v255
    %v319 = vpop.f32.mrf.mxu0
    %v320 = vadd.f32 0.0, %v319
    %321 = vmatmul.f32.gmra.mxu0 %v258
    %v322 = vpop.f32.mrf.mxu0
    %v323 = vadd.f32 0.0, %v322
    %324 = vmatmul.f32.gmra.mxu0 %v261
    %v325 = vpop.f32.mrf.mxu0
    %v326 = vadd.f32 0.0, %v325
    %327 = vmatmul.f32.gmra.mxu0 %v264
    %v328 = vpop.f32.mrf.mxu0
    %v329 = vadd.f32 0.0, %v328
    %330 = vmatmul.f32.gmra.mxu0 %v267
    %v331 = vpop.f32.mrf.mxu0
    %v332 = vadd.f32 0.0, %v331
    %333 = vmatmul.f32.gmra.mxu0 %v270
    %v334 = vpop.f32.mrf.mxu0
    %v335 = vadd.f32 0.0, %v334
    %336 = vmatmul.f32.gmra.mxu0 %v273
    %v337 = vpop.f32.mrf.mxu0
    %v338 = vadd.f32 0.0, %v337
    %339 = vmatmul.f32.gmra.mxu0 %v276
    %v340 = vpop.f32.mrf.mxu0
    %v341 = vadd.f32 0.0, %v340
    %342 = vmatmul.f32.gmra.mxu0 %v279
    %v343 = vpop.f32.mrf.mxu0
    %v344 = vadd.f32 0.0, %v343
    %345 = vmatmul.f32.gmra.mxu0 %v282
    %v346 = vpop.f32.mrf.mxu0
    %v347 = vadd.f32 0.0, %v346
    %348 = vdwg.mxu0
    %349 = vst.msk [vmem:[#allocation10] sm:$0xff] %vm70, %v302
    %350 = vst.msk [vmem:[#allocation10 + $0x8] sm:$0xff] %vm70, %v305
    %351 = vst.msk [vmem:[#allocation10 + $0x10] sm:$0xff] %vm70, %v308
    %352 = vst.msk [vmem:[#allocation10 + $0x18] sm:$0xff] %vm70, %v311
    %353 = vst.msk [vmem:[#allocation10 + $0x20] sm:$0xff] %vm70, %v314
    %354 = vst.msk [vmem:[#allocation10 + $0x28] sm:$0xff] %vm70, %v317
    %355 = vst.msk [vmem:[#allocation10 + $0x30] sm:$0xff] %vm70, %v320
    %356 = vst.msk [vmem:[#allocation10 + $0x38] sm:$0xff] %vm70, %v323
    %357 = vst.msk [vmem:[#allocation10 + $0x40] sm:$0xff] %vm70, %v326
    %358 = vst.msk [vmem:[#allocation10 + $0x48] sm:$0xff] %vm70, %v329
    %359 = vst.msk [vmem:[#allocation10 + $0x50] sm:$0xff] %vm70, %v332
    %360 = vst.msk [vmem:[#allocation10 + $0x58] sm:$0xff] %vm70, %v335
    %361 = vst.msk [vmem:[#allocation10 + $0x60] sm:$0xff] %vm70, %v338
    %362 = vst.msk [vmem:[#allocation10 + $0x68] sm:$0xff] %vm70, %v341
    %363 = vst.msk [vmem:[#allocation10 + $0x70] sm:$0xff] %vm70, %v344
    %364 = vst.msk [vmem:[#allocation10 + $0x78] sm:$0xff] %vm70, %v347
    // Predicated region
    $region26: #{tpu_custom_call.1} parent=1 // pred_check
      _
    $region27: #{tpu_custom_call.1} parent=1 // pred_check_branch
      %366 = sbr.rel (0) target = $region29
    $region28: #{tpu_custom_call.1} parent=1 // pred_region
      %368 = vsyncadd [#allocation7], 0
      %s369 = sshll.u32 [#allocation10], 4
      %s370 = int_to_ptr.vmem [resolvable:$true] %s369
      %s371 = sshll.u32 %s4, 4
      %s372 = int_to_ptr.hbm [resolvable:$true] %s371
      %377 = dma.vmem_to_hbm [thread:$0]  %s370, 2048, %s372, [#allocation7], 128, 128, 8
    $region29: #{tpu_custom_call.1} parent=1 // pred_fallthru
      _
    // Predicated region
    $region30: #{tpu_custom_call.1} parent=1 // pred_check
      _
    $region31: #{tpu_custom_call.1} parent=1 // pred_check_branch
      %379 = sbr.rel (0) target = $region33
    $region32: #{tpu_custom_call.1} parent=1 // pred_region
      %381 = dma.done [#allocation7], 2048
    $region33: #{tpu_custom_call.1} parent=1 // pred_fallthru
      _
    %382 = vsyncpa [#allocation6], 1
    %383 = vsyncpa [#allocation9], 1
    %384 = vsyncpa [#allocation7], 1

// kernel: tpu_custom_call.1
$region0: #{tpu_custom_call.1}
  #allocation0 [shape = 'u32[]', space=smem, size = 0x4, offset = 0x4, fixed_abs, tag = 'smem constant byte address 0x4 - core index']
  #allocation1 [shape = 'u32[72,128]{1,0:T(1,128)}', space=vmem, size = 0x9000, scoped, tag = 'internal scratch']
  %s0 = inlined_call_operand.hbm [shape: f32[16,16], index: 0, kind: input, shape index: {}]
  %s1 = inlined_call_operand.hbm [shape: f32[16,16], index: 1, kind: input, shape index: {}]
  %s2 = inlined_call_operand.hbm [shape: f32[8,16,16], index: 2, kind: input, shape index: {}]
  %s3 = inlined_call_operand.hbm [shape: f32[8,16,16], index: 3, kind: output, shape index: {}]
  %s4 = sld [smem:[#allocation0]]
  $region34: #{tpu_custom_call.1} parent=0
    _
  %s6 = ssub.s32 1, %s4
  %s7 = scalar_select 0, %s6, %s4
  $region1: #{tpu_custom_call.1} parent=0
    #allocation2 [shape = 'u8[8192]{0}', space=vmem, size = 0x2000, scoped, tag = 'input window, operand 0, single buffered']
    #allocation3 [shape = 's32[1]{0}', space=sflag, size = 0x4, scoped, tag = 'scoped memory for tpu_custom_call.1']
    #allocation4 [shape = 's32[1]{0}', space=sflag, size = 0x4, scoped, tag = 'scoped memory for tpu_custom_call.1']
    #allocation5 [shape = 'u8[8192]{0}', space=vmem, size = 0x2000, scoped, tag = 'input window, operand 1, single buffered']
    #allocation6 [shape = 's32[1]{0}', space=sflag, size = 0x4, scoped, tag = 'scoped memory for tpu_custom_call.1']
    #allocation7 [shape = 'u8[65536]{0}', space=vmem, size = 0x10000, scoped, tag = 'input window, operand 2, single buffered']
    #allocation8 [shape = 'u8[65536]{0}', space=vmem, size = 0x10000, scoped, tag = 'output window, operand 0, single buffered']
    %8 = vsyncpa [#allocation3], 0
    %9 = vsyncpa [#allocation6], 0
    %10 = vsyncpa [#allocation4], 0
    // Predicated region
    $region2: #{tpu_custom_call.1} parent=1 // pred_check
      _
    $region3: #{tpu_custom_call.1} parent=1 // pred_check_branch
      %12 = sbr.rel (0) target = $region5
    $region4: #{tpu_custom_call.1} parent=1 // pred_region
      %14 = vsyncadd [#allocation3], 0
      %s15 = sshll.u32 %s0, 4
      %s16 = int_to_ptr.hbm [resolvable:$true] %s15
      %s17 = sshll.u32 [#allocation2], 4
      %s18 = int_to_ptr.vmem [resolvable:$true] %s17
      %23 = dma.hbm_to_vmem [thread:$0]  %s16, 256, %s18, [#allocation3], 128, 128, 8
    $region5: #{tpu_custom_call.1} parent=1 // pred_fallthru
      _
    // Predicated region
    $region6: #{tpu_custom_call.1} parent=1 // pred_check
      _
    $region7: #{tpu_custom_call.1} parent=1 // pred_check_branch
      %25 = sbr.rel (0) target = $region9
    $region8: #{tpu_custom_call.1} parent=1 // pred_region
      %27 = vsyncadd [#allocation6], 0
      %s28 = sshll.u32 %s1, 4
      %s29 = int_to_ptr.hbm [resolvable:$true] %s28
      %s30 = sshll.u32 [#allocation5], 4
      %s31 = int_to_ptr.vmem [resolvable:$true] %s30
      %36 = dma.hbm_to_vmem [thread:$0]  %s29, 256, %s31, [#allocation6], 128, 128, 8
    $region9: #{tpu_custom_call.1} parent=1 // pred_fallthru
      _
    // Predicated region
    $region10: #{tpu_custom_call.1} parent=1 // pred_check
      _
    $region11: #{tpu_custom_call.1} parent=1 // pred_check_branch
      %38 = sbr.rel (0) target = $region13
    $region12: #{tpu_custom_call.1} parent=1 // pred_region
      %40 = vsyncadd [#allocation6], 0
      %s41 = sshll.u32 %s2, 4
      %s42 = int_to_ptr.hbm [resolvable:$true] %s41
      %s43 = sshll.u32 [#allocation7], 4
      %s44 = int_to_ptr.vmem [resolvable:$true] %s43
      %49 = dma.hbm_to_vmem [thread:$0]  %s42, 2048, %s44, [#allocation6], 128, 128, 8
    $region13: #{tpu_custom_call.1} parent=1 // pred_fallthru
      _
    // Predicated region
    $region14: #{tpu_custom_call.1} parent=1 // pred_check
      _
    $region15: #{tpu_custom_call.1} parent=1 // pred_check_branch
      %51 = sbr.rel (0) target = $region17
    $region16: #{tpu_custom_call.1} parent=1 // pred_region
      %53 = dma.done [#allocation3], 256
    $region17: #{tpu_custom_call.1} parent=1 // pred_fallthru
      _
    // Predicated region
    $region18: #{tpu_custom_call.1} parent=1 // pred_check
      _
    $region19: #{tpu_custom_call.1} parent=1 // pred_check_branch
      %55 = sbr.rel (0) target = $region21
    $region20: #{tpu_custom_call.1} parent=1 // pred_region
      %57 = dma.done [#allocation6], 256
    $region21: #{tpu_custom_call.1} parent=1 // pred_fallthru
      _
    // Predicated region
    $region22: #{tpu_custom_call.1} parent=1 // pred_check
      _
    $region23: #{tpu_custom_call.1} parent=1 // pred_check_branch
      %59 = sbr.rel (0) target = $region25
    $region24: #{tpu_custom_call.1} parent=1 // pred_region
      %61 = dma.done [#allocation6], 2048
    $region25: #{tpu_custom_call.1} parent=1 // pred_fallthru
      _
    %v62 = vld [vmem:[#allocation7] sm:$0xff]
    %v63 = vld [vmem:[#allocation7 + $0x8] sm:$0xff]
    %v64 = vld [vmem:[#allocation7 + $0x10] sm:$0xff]
    %v65 = vld [vmem:[#allocation7 + $0x18] sm:$0xff]
    %v66 = vld [vmem:[#allocation7 + $0x20] sm:$0xff]
    %v67 = vld [vmem:[#allocation7 + $0x28] sm:$0xff]
    %v68 = vld [vmem:[#allocation7 + $0x30] sm:$0xff]
    %v69 = vld [vmem:[#allocation7 + $0x38] sm:$0xff]
    %v70 = vld [vmem:[#allocation7 + $0x40] sm:$0xff]
    %v71 = vld [vmem:[#allocation7 + $0x48] sm:$0xff]
    %v72 = vld [vmem:[#allocation7 + $0x50] sm:$0xff]
    %v73 = vld [vmem:[#allocation7 + $0x58] sm:$0xff]
    %v74 = vld [vmem:[#allocation7 + $0x60] sm:$0xff]
    %v75 = vld [vmem:[#allocation7 + $0x68] sm:$0xff]
    %v76 = vld [vmem:[#allocation7 + $0x70] sm:$0xff]
    %v77 = vld [vmem:[#allocation7 + $0x78] sm:$0xff]
    %v78 = vld [vmem:[#allocation2] sm:$0xff]
    %v79 = vld [vmem:[#allocation2 + $0x8] sm:$0xff]
    %vm80 = vcmask 130048
    %v82 = vsel %vm80, %v78, 0
    %v85 = vsel %vm80, %v79, 0
    %87 = vmatpush.msra.mxu0 0.0
    %88 = vmatpush.msra.mxu0 0.0
    %89 = vmatpush.msra.mxu0 0.0
    %90 = vmatpush.msra.mxu0 0.0
    %91 = vmatpush.msra.mxu0 0.0
    %92 = vmatpush.msra.mxu0 0.0
    %93 = vmatpush.msra.mxu0 0.0
    %94 = vmatpush.msra.mxu0 0.0
    %95 = vmatpush.msra.mxu0 0.0
    %96 = vmatpush.msra.mxu0 0.0
    %97 = vmatpush.msra.mxu0 0.0
    %98 = vmatpush.msra.mxu0 0.0
    %99 = vmatpush.msra.mxu0 0.0
    %100 = vmatpush.msra.mxu0 0.0
    %101 = vmatpush.msra.mxu0 %v63
    %102 = vmatpush.msra.mxu0 %v62
    %103 = vmatmul.f32.gmra.mxu0 %v82
    %v104 = vpop.f32.mrf.mxu0
    %v105 = vadd.f32 0.0, %v104
    %106 = vmatmul.f32.gmra.mxu0 %v85
    %v107 = vpop.f32.mrf.mxu0
    %v108 = vadd.f32 0.0, %v107
    %109 = vdwg.mxu0
    %110 = vmatpush.msra.mxu0 0.0
    %111 = vmatpush.msra.mxu0 0.0
    %112 = vmatpush.msra.mxu0 0.0
    %113 = vmatpush.msra.mxu0 0.0
    %114 = vmatpush.msra.mxu0 0.0
    %115 = vmatpush.msra.mxu0 0.0
    %116 = vmatpush.msra.mxu0 0.0
    %117 = vmatpush.msra.mxu0 0.0
    %118 = vmatpush.msra.mxu0 0.0
    %119 = vmatpush.msra.mxu0 0.0
    %120 = vmatpush.msra.mxu0 0.0
    %121 = vmatpush.msra.mxu0 0.0
    %122 = vmatpush.msra.mxu0 0.0
    %123 = vmatpush.msra.mxu0 0.0
    %124 = vmatpush.msra.mxu0 %v65
    %125 = vmatpush.msra.mxu0 %v64
    %126 = vmatmul.f32.gmra.mxu0 %v82
    %v127 = vpop.f32.mrf.mxu0
    %v128 = vadd.f32 0.0, %v127
    %129 = vmatmul.f32.gmra.mxu0 %v85
    %v130 = vpop.f32.mrf.mxu0
    %v131 = vadd.f32 0.0, %v130
    %132 = vdwg.mxu0
    %133 = vmatpush.msra.mxu0 0.0
    %134 = vmatpush.msra.mxu0 0.0
    %135 = vmatpush.msra.mxu0 0.0
    %136 = vmatpush.msra.mxu0 0.0
    %137 = vmatpush.msra.mxu0 0.0
    %138 = vmatpush.msra.mxu0 0.0
    %139 = vmatpush.msra.mxu0 0.0
    %140 = vmatpush.msra.mxu0 0.0
    %141 = vmatpush.msra.mxu0 0.0
    %142 = vmatpush.msra.mxu0 0.0
    %143 = vmatpush.msra.mxu0 0.0
    %144 = vmatpush.msra.mxu0 0.0
    %145 = vmatpush.msra.mxu0 0.0
    %146 = vmatpush.msra.mxu0 0.0
    %147 = vmatpush.msra.mxu0 %v67
    %148 = vmatpush.msra.mxu0 %v66
    %149 = vmatmul.f32.gmra.mxu0 %v82
    %v150 = vpop.f32.mrf.mxu0
    %v151 = vadd.f32 0.0, %v150
    %152 = vmatmul.f32.gmra.mxu0 %v85
    %v153 = vpop.f32.mrf.mxu0
    %v154 = vadd.f32 0.0, %v153
    %155 = vdwg.mxu0
    %156 = vmatpush.msra.mxu0 0.0
    %157 = vmatpush.msra.mxu0 0.0
    %158 = vmatpush.msra.mxu0 0.0
    %159 = vmatpush.msra.mxu0 0.0
    %160 = vmatpush.msra.mxu0 0.0
    %161 = vmatpush.msra.mxu0 0.0
    %162 = vmatpush.msra.mxu0 0.0
    %163 = vmatpush.msra.mxu0 0.0
    %164 = vmatpush.msra.mxu0 0.0
    %165 = vmatpush.msra.mxu0 0.0
    %166 = vmatpush.msra.mxu0 0.0
    %167 = vmatpush.msra.mxu0 0.0
    %168 = vmatpush.msra.mxu0 0.0
    %169 = vmatpush.msra.mxu0 0.0
    %170 = vmatpush.msra.mxu0 %v69
    %171 = vmatpush.msra.mxu0 %v68
    %172 = vmatmul.f32.gmra.mxu0 %v82
    %v173 = vpop.f32.mrf.mxu0
    %v174 = vadd.f32 0.0, %v173
    %175 = vmatmul.f32.gmra.mxu0 %v85
    %v176 = vpop.f32.mrf.mxu0
    %v177 = vadd.f32 0.0, %v176
    %178 = vdwg.mxu0
    %179 = vmatpush.msra.mxu0 0.0
    %180 = vmatpush.msra.mxu0 0.0
    %181 = vmatpush.msra.mxu0 0.0
    %182 = vmatpush.msra.mxu0 0.0
    %183 = vmatpush.msra.mxu0 0.0
    %184 = vmatpush.msra.mxu0 0.0
    %185 = vmatpush.msra.mxu0 0.0
    %186 = vmatpush.msra.mxu0 0.0
    %187 = vmatpush.msra.mxu0 0.0
    %188 = vmatpush.msra.mxu0 0.0
    %189 = vmatpush.msra.mxu0 0.0
    %190 = vmatpush.msra.mxu0 0.0
    %191 = vmatpush.msra.mxu0 0.0
    %192 = vmatpush.msra.mxu0 0.0
    %193 = vmatpush.msra.mxu0 %v71
    %194 = vmatpush.msra.mxu0 %v70
    %195 = vmatmul.f32.gmra.mxu0 %v82
    %v196 = vpop.f32.mrf.mxu0
    %v197 = vadd.f32 0.0, %v196
    %198 = vmatmul.f32.gmra.mxu0 %v85
    %v199 = vpop.f32.mrf.mxu0
    %v200 = vadd.f32 0.0, %v199
    %201 = vdwg.mxu0
    %202 = vmatpush.msra.mxu0 0.0
    %203 = vmatpush.msra.mxu0 0.0
    %204 = vmatpush.msra.mxu0 0.0
    %205 = vmatpush.msra.mxu0 0.0
    %206 = vmatpush.msra.mxu0 0.0
    %207 = vmatpush.msra.mxu0 0.0
    %208 = vmatpush.msra.mxu0 0.0
    %209 = vmatpush.msra.mxu0 0.0
    %210 = vmatpush.msra.mxu0 0.0
    %211 = vmatpush.msra.mxu0 0.0
    %212 = vmatpush.msra.mxu0 0.0
    %213 = vmatpush.msra.mxu0 0.0
    %214 = vmatpush.msra.mxu0 0.0
    %215 = vmatpush.msra.mxu0 0.0
    %216 = vmatpush.msra.mxu0 %v73
    %217 = vmatpush.msra.mxu0 %v72
    %218 = vmatmul.f32.gmra.mxu0 %v82
    %v219 = vpop.f32.mrf.mxu0
    %v220 = vadd.f32 0.0, %v219
    %221 = vmatmul.f32.gmra.mxu0 %v85
    %v222 = vpop.f32.mrf.mxu0
    %v223 = vadd.f32 0.0, %v222
    %224 = vdwg.mxu0
    %225 = vmatpush.msra.mxu0 0.0
    %226 = vmatpush.msra.mxu0 0.0
    %227 = vmatpush.msra.mxu0 0.0
    %228 = vmatpush.msra.mxu0 0.0
    %229 = vmatpush.msra.mxu0 0.0
    %230 = vmatpush.msra.mxu0 0.0
    %231 = vmatpush.msra.mxu0 0.0
    %232 = vmatpush.msra.mxu0 0.0
    %233 = vmatpush.msra.mxu0 0.0
    %234 = vmatpush.msra.mxu0 0.0
    %235 = vmatpush.msra.mxu0 0.0
    %236 = vmatpush.msra.mxu0 0.0
    %237 = vmatpush.msra.mxu0 0.0
    %238 = vmatpush.msra.mxu0 0.0
    %239 = vmatpush.msra.mxu0 %v75
    %240 = vmatpush.msra.mxu0 %v74
    %241 = vmatmul.f32.gmra.mxu0 %v82
    %v242 = vpop.f32.mrf.mxu0
    %v243 = vadd.f32 0.0, %v242
    %244 = vmatmul.f32.gmra.mxu0 %v85
    %v245 = vpop.f32.mrf.mxu0
    %v246 = vadd.f32 0.0, %v245
    %247 = vdwg.mxu0
    %248 = vmatpush.msra.mxu0 0.0
    %249 = vmatpush.msra.mxu0 0.0
    %250 = vmatpush.msra.mxu0 0.0
    %251 = vmatpush.msra.mxu0 0.0
    %252 = vmatpush.msra.mxu0 0.0
    %253 = vmatpush.msra.mxu0 0.0
    %254 = vmatpush.msra.mxu0 0.0
    %255 = vmatpush.msra.mxu0 0.0
    %256 = vmatpush.msra.mxu0 0.0
    %257 = vmatpush.msra.mxu0 0.0
    %258 = vmatpush.msra.mxu0 0.0
    %259 = vmatpush.msra.mxu0 0.0
    %260 = vmatpush.msra.mxu0 0.0
    %261 = vmatpush.msra.mxu0 0.0
    %262 = vmatpush.msra.mxu0 %v77
    %263 = vmatpush.msra.mxu0 %v76
    %264 = vmatmul.f32.gmra.mxu0 %v82
    %v265 = vpop.f32.mrf.mxu0
    %v266 = vadd.f32 0.0, %v265
    %267 = vmatmul.f32.gmra.mxu0 %v85
    %v268 = vpop.f32.mrf.mxu0
    %v269 = vadd.f32 0.0, %v268
    %270 = vdwg.mxu0
    %v271 = vld [vmem:[#allocation5] sm:$0xff]
    %v272 = vld [vmem:[#allocation5 + $0x8] sm:$0xff]
    %v274 = vsel %vm80, %v105, 0
    %v277 = vsel %vm80, %v108, 0
    %v280 = vsel %vm80, %v128, 0
    %v283 = vsel %vm80, %v131, 0
    %v286 = vsel %vm80, %v151, 0
    %v289 = vsel %vm80, %v154, 0
    %v292 = vsel %vm80, %v174, 0
    %v295 = vsel %vm80, %v177, 0
    %v298 = vsel %vm80, %v197, 0
    %v301 = vsel %vm80, %v200, 0
    %v304 = vsel %vm80, %v220, 0
    %v307 = vsel %vm80, %v223, 0
    %v310 = vsel %vm80, %v243, 0
    %v313 = vsel %vm80, %v246, 0
    %v316 = vsel %vm80, %v266, 0
    %v319 = vsel %vm80, %v269, 0
    %321 = vmatpush.msra.mxu0 0.0
    %322 = vmatpush.msra.mxu0 0.0
    %323 = vmatpush.msra.mxu0 0.0
    %324 = vmatpush.msra.mxu0 0.0
    %325 = vmatpush.msra.mxu0 0.0
    %326 = vmatpush.msra.mxu0 0.0
    %327 = vmatpush.msra.mxu0 0.0
    %328 = vmatpush.msra.mxu0 0.0
    %329 = vmatpush.msra.mxu0 0.0
    %330 = vmatpush.msra.mxu0 0.0
    %331 = vmatpush.msra.mxu0 0.0
    %332 = vmatpush.msra.mxu0 0.0
    %333 = vmatpush.msra.mxu0 0.0
    %334 = vmatpush.msra.mxu0 0.0
    %335 = vmatpush.msra.mxu0 %v272
    %336 = vmatpush.msra.mxu0 %v271
    %337 = vmatmul.f32.gmra.mxu0 %v274
    %v338 = vpop.f32.mrf.mxu0
    %v339 = vadd.f32 0.0, %v338
    %340 = vmatmul.f32.gmra.mxu0 %v277
    %v341 = vpop.f32.mrf.mxu0
    %v342 = vadd.f32 0.0, %v341
    %343 = vmatmul.f32.gmra.mxu0 %v280
    %v344 = vpop.f32.mrf.mxu0
    %v345 = vadd.f32 0.0, %v344
    %346 = vmatmul.f32.gmra.mxu0 %v283
    %v347 = vpop.f32.mrf.mxu0
    %v348 = vadd.f32 0.0, %v347
    %349 = vmatmul.f32.gmra.mxu0 %v286
    %v350 = vpop.f32.mrf.mxu0
    %v351 = vadd.f32 0.0, %v350
    %352 = vmatmul.f32.gmra.mxu0 %v289
    %v353 = vpop.f32.mrf.mxu0
    %v354 = vadd.f32 0.0, %v353
    %355 = vmatmul.f32.gmra.mxu0 %v292
    %v356 = vpop.f32.mrf.mxu0
    %v357 = vadd.f32 0.0, %v356
    %358 = vmatmul.f32.gmra.mxu0 %v295
    %v359 = vpop.f32.mrf.mxu0
    %v360 = vadd.f32 0.0, %v359
    %361 = vmatmul.f32.gmra.mxu0 %v298
    %v362 = vpop.f32.mrf.mxu0
    %v363 = vadd.f32 0.0, %v362
    %364 = vmatmul.f32.gmra.mxu0 %v301
    %v365 = vpop.f32.mrf.mxu0
    %v366 = vadd.f32 0.0, %v365
    %367 = vmatmul.f32.gmra.mxu0 %v304
    %v368 = vpop.f32.mrf.mxu0
    %v369 = vadd.f32 0.0, %v368
    %370 = vmatmul.f32.gmra.mxu0 %v307
    %v371 = vpop.f32.mrf.mxu0
    %v372 = vadd.f32 0.0, %v371
    %373 = vmatmul.f32.gmra.mxu0 %v310
    %v374 = vpop.f32.mrf.mxu0
    %v375 = vadd.f32 0.0, %v374
    %376 = vmatmul.f32.gmra.mxu0 %v313
    %v377 = vpop.f32.mrf.mxu0
    %v378 = vadd.f32 0.0, %v377
    %379 = vmatmul.f32.gmra.mxu0 %v316
    %v380 = vpop.f32.mrf.mxu0
    %v381 = vadd.f32 0.0, %v380
    %382 = vmatmul.f32.gmra.mxu0 %v319
    %v383 = vpop.f32.mrf.mxu0
    %v384 = vadd.f32 0.0, %v383
    %385 = vdwg.mxu0
    %386 = vst.msk [vmem:[#allocation8] sm:$0xff] %vm80, %v339
    %387 = vst.msk [vmem:[#allocation8 + $0x8] sm:$0xff] %vm80, %v342
    %388 = vst.msk [vmem:[#allocation8 + $0x10] sm:$0xff] %vm80, %v345
    %389 = vst.msk [vmem:[#allocation8 + $0x18] sm:$0xff] %vm80, %v348
    %390 = vst.msk [vmem:[#allocation8 + $0x20] sm:$0xff] %vm80, %v351
    %391 = vst.msk [vmem:[#allocation8 + $0x28] sm:$0xff] %vm80, %v354
    %392 = vst.msk [vmem:[#allocation8 + $0x30] sm:$0xff] %vm80, %v357
    %393 = vst.msk [vmem:[#allocation8 + $0x38] sm:$0xff] %vm80, %v360
    %394 = vst.msk [vmem:[#allocation8 + $0x40] sm:$0xff] %vm80, %v363
    %395 = vst.msk [vmem:[#allocation8 + $0x48] sm:$0xff] %vm80, %v366
    %396 = vst.msk [vmem:[#allocation8 + $0x50] sm:$0xff] %vm80, %v369
    %397 = vst.msk [vmem:[#allocation8 + $0x58] sm:$0xff] %vm80, %v372
    %398 = vst.msk [vmem:[#allocation8 + $0x60] sm:$0xff] %vm80, %v375
    %399 = vst.msk [vmem:[#allocation8 + $0x68] sm:$0xff] %vm80, %v378
    %400 = vst.msk [vmem:[#allocation8 + $0x70] sm:$0xff] %vm80, %v381
    %401 = vst.msk [vmem:[#allocation8 + $0x78] sm:$0xff] %vm80, %v384
    // Predicated region
    $region26: #{tpu_custom_call.1} parent=1 // pred_check
      _
    $region27: #{tpu_custom_call.1} parent=1 // pred_check_branch
      %403 = sbr.rel (0) target = $region29
    $region28: #{tpu_custom_call.1} parent=1 // pred_region
      %405 = vsyncadd [#allocation4], 0
      %s406 = sshll.u32 [#allocation8], 4
      %s407 = int_to_ptr.vmem [resolvable:$true] %s406
      %s408 = sshll.u32 %s3, 4
      %s409 = int_to_ptr.hbm [resolvable:$true] %s408
      %414 = dma.vmem_to_hbm [thread:$0]  %s407, 2048, %s409, [#allocation4], 128, 128, 8
    $region29: #{tpu_custom_call.1} parent=1 // pred_fallthru
      _
    // Predicated region
    $region30: #{tpu_custom_call.1} parent=1 // pred_check
      _
    $region31: #{tpu_custom_call.1} parent=1 // pred_check_branch
      %416 = sbr.rel (0) target = $region33
    $region32: #{tpu_custom_call.1} parent=1 // pred_region
      %418 = dma.done [#allocation4], 2048
    $region33: #{tpu_custom_call.1} parent=1 // pred_fallthru
      _
    %419 = vsyncpa [#allocation3], 1
    %420 = vsyncpa [#allocation6], 1
    %421 = vsyncpa [#allocation4], 1

</llo_original>
